<compile_context>
chip_gen: v7x
topology: tpu7x:2x2x1
jax: 0.10.0
libtpu: 0.0.40
codegen_flags: <defaults>
</compile_context>

<pallas_src>
import functools

import jax
import jax.numpy as jnp
import numpy as np
from jax.experimental import pallas as pl
from jax.experimental.pallas import tpu as pltpu

BN_EPS = 1e-5
LANE = 128

_VMEM_SPEC = pl.BlockSpec(memory_space=pltpu.MemorySpace.VMEM)


def _round_up(n, m):
    return ((n + m - 1) // m) * m


# ----------------------------- Fused Pallas kernel ----------------------------- #

def _make_fused_mlp_kernel(n_hidden):
    """Whole MLP in one kernel body; activations stay resident in VMEM/vregs.

    Ref layout: (x, [w, gamma, beta] * n_hidden, w_out, b_out, out).
    """

    def kernel(*refs):
        x_ref = refs[0]
        o_ref = refs[-1]
        p_refs = refs[1:-1]

        h = x_ref[...].astype(jnp.float32)      # (B, d_in) f32
        idx = 0
        for _ in range(n_hidden):
            w_ref, g_ref, be_ref = p_refs[idx:idx + 3]
            idx += 3
            w = w_ref[...]                       # bf16 (in, padded_out); padded cols are 0
            # bf16 x bf16 -> f32 accumulate on the MXU.  Hidden Linear bias is omitted:
            # it is exactly cancelled by the BN mean subtraction below.
            y = jnp.dot(h.astype(w.dtype), w, preferred_element_type=jnp.float32)

            # BatchNorm1d (training-mode batch statistics), folded to one FMA per element:
            #   scale = gamma / sqrt(var + eps)      (1, N)
            #   shift = beta  - mean * scale         (1, N)
            #   y_bn  = y * scale + shift            (M, N)
            m = jnp.mean(y, axis=0, keepdims=True)
            v = jnp.mean(y * y, axis=0, keepdims=True) - m * m   # biased variance
            scale = jax.lax.rsqrt(v + BN_EPS) * g_ref[...]       # padded gamma = 0 keeps pads 0
            shift = be_ref[...] - m * scale

            # ReLU (Dropout is identity in eval mode).
            h = jnp.maximum(y * scale + shift, 0.0)

        w_ref, b_ref = p_refs[idx], p_refs[idx + 1]
        w = w_ref[...]
        y = jnp.dot(h.astype(w.dtype), w, preferred_element_type=jnp.float32) + b_ref[...]
        o_ref[...] = y.astype(o_ref.dtype)       # lane-dense store (padded_out % 128 == 0)

    return kernel


@functools.partial(jax.jit, static_argnames=("real_out_dim", "n_hidden"))
def _fused_forward(x, flat_params, real_out_dim, n_hidden):
    batch = x.shape[0]
    pad_out_final = flat_params[-1].shape[1]

    # ---- cost model / VMEM budget (all Python ints at trace time) ----
    flops = 0
    transcendentals = 0
    max_pad = pad_out_final
    for i in range(n_hidden):
        w = flat_params[3 * i]
        flops += 2 * batch * w.shape[0] * w.shape[1]        # matmul
        flops += 6 * batch * w.shape[1]                     # BN + ReLU elementwise
        transcendentals += w.shape[1]                       # rsqrt per feature
        max_pad = max(max_pad, w.shape[1])
    w_out = flat_params[3 * n_hidden]
    flops += 2 * batch * w_out.shape[0] * w_out.shape[1]

    bytes_accessed = x.size * x.dtype.itemsize + batch * pad_out_final * 4
    for p in flat_params:
        bytes_accessed += p.size * p.dtype.itemsize

    # Whole batch + a few live activation slabs must fit in VMEM (gridless design).
    vmem_need = bytes_accessed + 6 * batch * max_pad * 4
    assert vmem_need < 48 * 1024 * 1024, (
        "Batch too large for the fused gridless kernel; needs the batch-grid + "
        "cross-tile BN accumulator variant (see TODO).")
    vmem_limit = int(min(max(2 * vmem_need, 32 * 1024 * 1024), 64 * 1024 * 1024))

    out = pl.pallas_call(
        _make_fused_mlp_kernel(n_hidden),
        out_shape=jax.ShapeDtypeStruct((batch, pad_out_final), jnp.float32),
        in_specs=[_VMEM_SPEC] * (1 + len(flat_params)),
        out_specs=_VMEM_SPEC,
        compiler_params=pltpu.CompilerParams(vmem_limit_bytes=vmem_limit),
        cost_estimate=pl.CostEstimate(flops=flops,
                                      transcendentals=transcendentals,
                                      bytes_accessed=bytes_accessed),
    )(x, *flat_params)

    # Slice back to the module's true output width.  Drop this if downstream code can
    # consume the padded (batch, pad_out_final) slab directly.
    return out[:, :real_out_dim]


# ----------------------------- Module wrapper ----------------------------- #

def init_mlp_params(key, input_dim, embed_dims, output_layer=True,
                    matmul_dtype=jnp.bfloat16):
    """Parameters following the PyTorch module's shapes.

    Hidden layer i: weight (in_rows, padded_out) bf16 (padded cols = 0), BN gamma/beta
    (1, padded_out) f32 (padded gamma = 0).  No hidden Linear bias (cancelled by BN).
    Output layer: weight (in_rows, padded_input_dim) bf16 + bias (1, padded_input_dim) f32.
    Only the OUTGOING feature dim is padded; the first layer keeps the true input_dim rows
    so the caller never pads x.
    """
    params = {"hidden": [], "out": None, "input_dim": input_dim}
    in_rows = input_dim
    for embed_dim in embed_dims:
        pad_out = _round_up(embed_dim, LANE)
        key, k_w, k_g = jax.random.split(key, 3)
        scale = 1.0 / np.sqrt(in_rows)
        w = jax.random.uniform(k_w, (in_rows, embed_dim), jnp.float32, -scale, scale)
        w = jnp.pad(w, ((0, 0), (0, pad_out - embed_dim))).astype(matmul_dtype)
        gamma = 1.0 + 0.01 * jax.random.normal(k_g, (1, embed_dim), jnp.float32)
        gamma = jnp.pad(gamma, ((0, 0), (0, pad_out - embed_dim)))   # padded gamma = 0
        beta = jnp.zeros((1, pad_out), jnp.float32)
        params["hidden"].append((w, gamma, beta))
        in_rows = pad_out
    if output_layer:
        pad_out = _round_up(input_dim, LANE)
        key, k_w, k_b = jax.random.split(key, 3)
        scale = 1.0 / np.sqrt(in_rows)
        w = jax.random.uniform(k_w, (in_rows, input_dim), jnp.float32, -scale, scale)
        w = jnp.pad(w, ((0, 0), (0, pad_out - input_dim))).astype(matmul_dtype)
        b = 0.01 * jax.random.normal(k_b, (1, input_dim), jnp.float32)
        b = jnp.pad(b, ((0, 0), (0, pad_out - input_dim)))
        params["out"] = (w, b)
    return params


def mlp_forward_pallas(params, x):
    """Fused Pallas forward pass: (batch, input_dim) -> (batch, input_dim)."""
    flat = []
    for (w, g, be) in params["hidden"]:
        flat += [w, g, be]
    flat += list(params["out"])
    return _fused_forward(x, tuple(flat), params["input_dim"], len(params["hidden"]))


def mlp_forward_reference(params, x):
    """Pure-JAX reference (standard BN formulation) using the same bf16 weights."""
    h = x.astype(jnp.float32)
    for (w, g, be) in params["hidden"]:
        y = jnp.dot(h.astype(w.dtype), w, preferred_element_type=jnp.float32)
        m = jnp.mean(y, axis=0, keepdims=True)
        v = jnp.mean((y - m) ** 2, axis=0, keepdims=True)
        y = (y - m) * jax.lax.rsqrt(v + BN_EPS) * g + be
        h = jnp.maximum(y, 0.0)
    w, b = params["out"]
    y = jnp.dot(h.astype(w.dtype), w, preferred_element_type=jnp.float32) + b
    return y[:, :params["input_dim"]]


# --------------------------------- Main ------------------------------------ #

if __name__ == "__main__":
    batch = 256          # M >= 256 so the 256-wide MXU on v6e/v7x is actually occupied
    input_dim = 32
    embed_dims = (64, 32)
    dropout = 0.2        # identity at inference

    key = jax.random.PRNGKey(0)
    key, k_x, k_p = jax.random.split(key, 3)
    x = jax.random.normal(k_x, (batch, input_dim), jnp.float32)

    params = init_mlp_params(k_p, input_dim, embed_dims, output_layer=True)

    out = jax.block_until_ready(mlp_forward_pallas(params, x))
    ref = jax.block_until_ready(mlp_forward_reference(params, x))

    np.testing.assert_allclose(np.asarray(out), np.asarray(ref), rtol=3e-3, atol=3e-3)
    assert out.shape == (batch, input_dim)
    print("KERNEL_OK")
</pallas_src>

<mosaic_0001>
module attributes {stable_mosaic.version = 11 : i64} {
  func.func @kernel(%arg0: memref<256x32xf32, #tpu.memory_space<vmem>>, %arg1: memref<32x128xbf16, #tpu.memory_space<vmem>>, %arg2: memref<1x128xf32, #tpu.memory_space<vmem>>, %arg3: memref<1x128xf32, #tpu.memory_space<vmem>>, %arg4: memref<128x128xbf16, #tpu.memory_space<vmem>>, %arg5: memref<1x128xf32, #tpu.memory_space<vmem>>, %arg6: memref<1x128xf32, #tpu.memory_space<vmem>>, %arg7: memref<128x128xbf16, #tpu.memory_space<vmem>>, %arg8: memref<1x128xf32, #tpu.memory_space<vmem>>, %arg9: memref<256x128xf32, #tpu.memory_space<vmem>>) attributes {dimension_semantics = [], scalar_prefetch = 0 : i64, scratch_operands = 0 : i64, tpu.core_type = #tpu.core_type<tc>} {
    %c0 = arith.constant 0 : index
    %c0_0 = arith.constant 0 : index
    %0 = vector.load %arg0[%c0, %c0_0] : memref<256x32xf32, #tpu.memory_space<vmem>>, vector<256x32xf32>
    %c0_1 = arith.constant 0 : index
    %c0_2 = arith.constant 0 : index
    %1 = vector.load %arg1[%c0_1, %c0_2] : memref<32x128xbf16, #tpu.memory_space<vmem>>, vector<32x128xbf16>
    %2 = arith.truncf %0 : vector<256x32xf32> to vector<256x32xbf16>
    %cst = arith.constant dense<0.000000e+00> : vector<256x128xf32>
    %3 = tpu.matmul %2, %1, %cst {dimension_numbers = #tpu.dot_dimension_numbers<[1], [0], [0], [1], [0, 0, 1, 1], [], []>} : vector<256x32xbf16>, vector<32x128xbf16>, vector<256x128xf32> -> vector<256x128xf32>
    %cst_3 = arith.constant dense<0.000000e+00> : vector<128xf32>
    %4 = vector.multi_reduction <add>, %3, %cst_3 [0] : vector<256x128xf32> to vector<128xf32>
    %5 = vector.shape_cast %4 : vector<128xf32> to vector<1x128xf32>
    %cst_4 = arith.constant 2.560000e+02 : f32
    %6 = vector.broadcast %cst_4 : f32 to vector<1x128xf32>
    %7 = arith.divf %5, %6 : vector<1x128xf32>
    %8 = arith.mulf %3, %3 : vector<256x128xf32>
    %cst_5 = arith.constant dense<0.000000e+00> : vector<128xf32>
    %9 = vector.multi_reduction <add>, %8, %cst_5 [0] : vector<256x128xf32> to vector<128xf32>
    %10 = vector.shape_cast %9 : vector<128xf32> to vector<1x128xf32>
    %cst_6 = arith.constant 2.560000e+02 : f32
    %11 = vector.broadcast %cst_6 : f32 to vector<1x128xf32>
    %12 = arith.divf %10, %11 : vector<1x128xf32>
    %13 = arith.mulf %7, %7 : vector<1x128xf32>
    %14 = arith.subf %12, %13 : vector<1x128xf32>
    %cst_7 = arith.constant 9.99999974E-6 : f32
    %15 = vector.broadcast %cst_7 : f32 to vector<1x128xf32>
    %16 = arith.addf %14, %15 : vector<1x128xf32>
    %17 = math.rsqrt %16 : vector<1x128xf32>
    %c0_8 = arith.constant 0 : index
    %c0_9 = arith.constant 0 : index
    %18 = vector.load %arg2[%c0_8, %c0_9] : memref<1x128xf32, #tpu.memory_space<vmem>>, vector<1x128xf32>
    %19 = arith.mulf %17, %18 : vector<1x128xf32>
    %c0_10 = arith.constant 0 : index
    %c0_11 = arith.constant 0 : index
    %20 = vector.load %arg3[%c0_10, %c0_11] : memref<1x128xf32, #tpu.memory_space<vmem>>, vector<1x128xf32>
    %21 = arith.mulf %7, %19 : vector<1x128xf32>
    %22 = arith.subf %20, %21 : vector<1x128xf32>
    %23 = vector.broadcast %19 : vector<1x128xf32> to vector<256x128xf32>
    %24 = arith.mulf %3, %23 : vector<256x128xf32>
    %25 = vector.broadcast %22 : vector<1x128xf32> to vector<256x128xf32>
    %26 = arith.addf %24, %25 : vector<256x128xf32>
    %cst_12 = arith.constant 0.000000e+00 : f32
    %27 = vector.broadcast %cst_12 : f32 to vector<256x128xf32>
    %28 = arith.maximumf %26, %27 : vector<256x128xf32>
    %c0_13 = arith.constant 0 : index
    %c0_14 = arith.constant 0 : index
    %29 = vector.load %arg4[%c0_13, %c0_14] : memref<128x128xbf16, #tpu.memory_space<vmem>>, vector<128x128xbf16>
    %30 = arith.truncf %28 : vector<256x128xf32> to vector<256x128xbf16>
    %cst_15 = arith.constant dense<0.000000e+00> : vector<256x128xf32>
    %31 = tpu.matmul %30, %29, %cst_15 {dimension_numbers = #tpu.dot_dimension_numbers<[1], [0], [0], [1], [0, 0, 1, 1], [], []>} : vector<256x128xbf16>, vector<128x128xbf16>, vector<256x128xf32> -> vector<256x128xf32>
    %cst_16 = arith.constant dense<0.000000e+00> : vector<128xf32>
    %32 = vector.multi_reduction <add>, %31, %cst_16 [0] : vector<256x128xf32> to vector<128xf32>
    %33 = vector.shape_cast %32 : vector<128xf32> to vector<1x128xf32>
    %cst_17 = arith.constant 2.560000e+02 : f32
    %34 = vector.broadcast %cst_17 : f32 to vector<1x128xf32>
    %35 = arith.divf %33, %34 : vector<1x128xf32>
    %36 = arith.mulf %31, %31 : vector<256x128xf32>
    %cst_18 = arith.constant dense<0.000000e+00> : vector<128xf32>
    %37 = vector.multi_reduction <add>, %36, %cst_18 [0] : vector<256x128xf32> to vector<128xf32>
    %38 = vector.shape_cast %37 : vector<128xf32> to vector<1x128xf32>
    %cst_19 = arith.constant 2.560000e+02 : f32
    %39 = vector.broadcast %cst_19 : f32 to vector<1x128xf32>
    %40 = arith.divf %38, %39 : vector<1x128xf32>
    %41 = arith.mulf %35, %35 : vector<1x128xf32>
    %42 = arith.subf %40, %41 : vector<1x128xf32>
    %cst_20 = arith.constant 9.99999974E-6 : f32
    %43 = vector.broadcast %cst_20 : f32 to vector<1x128xf32>
    %44 = arith.addf %42, %43 : vector<1x128xf32>
    %45 = math.rsqrt %44 : vector<1x128xf32>
    %c0_21 = arith.constant 0 : index
    %c0_22 = arith.constant 0 : index
    %46 = vector.load %arg5[%c0_21, %c0_22] : memref<1x128xf32, #tpu.memory_space<vmem>>, vector<1x128xf32>
    %47 = arith.mulf %45, %46 : vector<1x128xf32>
    %c0_23 = arith.constant 0 : index
    %c0_24 = arith.constant 0 : index
    %48 = vector.load %arg6[%c0_23, %c0_24] : memref<1x128xf32, #tpu.memory_space<vmem>>, vector<1x128xf32>
    %49 = arith.mulf %35, %47 : vector<1x128xf32>
    %50 = arith.subf %48, %49 : vector<1x128xf32>
    %51 = vector.broadcast %47 : vector<1x128xf32> to vector<256x128xf32>
    %52 = arith.mulf %31, %51 : vector<256x128xf32>
    %53 = vector.broadcast %50 : vector<1x128xf32> to vector<256x128xf32>
    %54 = arith.addf %52, %53 : vector<256x128xf32>
    %cst_25 = arith.constant 0.000000e+00 : f32
    %55 = vector.broadcast %cst_25 : f32 to vector<256x128xf32>
    %56 = arith.maximumf %54, %55 : vector<256x128xf32>
    %c0_26 = arith.constant 0 : index
    %c0_27 = arith.constant 0 : index
    %57 = vector.load %arg7[%c0_26, %c0_27] : memref<128x128xbf16, #tpu.memory_space<vmem>>, vector<128x128xbf16>
    %58 = arith.truncf %56 : vector<256x128xf32> to vector<256x128xbf16>
    %cst_28 = arith.constant dense<0.000000e+00> : vector<256x128xf32>
    %59 = tpu.matmul %58, %57, %cst_28 {dimension_numbers = #tpu.dot_dimension_numbers<[1], [0], [0], [1], [0, 0, 1, 1], [], []>} : vector<256x128xbf16>, vector<128x128xbf16>, vector<256x128xf32> -> vector<256x128xf32>
    %c0_29 = arith.constant 0 : index
    %c0_30 = arith.constant 0 : index
    %60 = vector.load %arg8[%c0_29, %c0_30] : memref<1x128xf32, #tpu.memory_space<vmem>>, vector<1x128xf32>
    %61 = vector.broadcast %60 : vector<1x128xf32> to vector<256x128xf32>
    %62 = arith.addf %59, %61 : vector<256x128xf32>
    %c0_31 = arith.constant 0 : index
    %c0_32 = arith.constant 0 : index
    %63 = vector.load %arg9[%c0_31, %c0_32] : memref<256x128xf32, #tpu.memory_space<vmem>>, vector<256x128xf32>
    tpu.vector_store %arg9[%c0_31, %c0_32], %62 {strides = array<i32>} : memref<256x128xf32, #tpu.memory_space<vmem>>, vector<256x128xf32>,
    return
  }
}

</mosaic_0001>

<llo_original>
// kernel: _fused_forward.1
$region0: #{_fused_forward.1}
  #allocation0 [shape = 'u32[]', space=smem, size = 0x4, offset = 0x4, fixed_abs, tag = 'smem constant byte address 0x4 - core index']
  #allocation1 [shape = 'u32[144,128]{1,0:T(1,128)}', space=vmem, size = 0x12000, scoped, tag = 'internal scratch']
  %s0 = inlined_call_operand.vmem [shape: f32[256,32], index: 0, kind: input, shape index: {}]
  %s1 = inlined_call_operand.vmem [shape: bf16[32,128], index: 1, kind: input, shape index: {}]
  %s2 = inlined_call_operand.vmem [shape: f32[1,128], index: 2, kind: input, shape index: {}]
  %s3 = inlined_call_operand.vmem [shape: f32[1,128], index: 3, kind: input, shape index: {}]
  %s4 = inlined_call_operand.vmem [shape: bf16[128,128], index: 4, kind: input, shape index: {}]
  %s5 = inlined_call_operand.vmem [shape: f32[1,128], index: 5, kind: input, shape index: {}]
  %s6 = inlined_call_operand.vmem [shape: f32[1,128], index: 6, kind: input, shape index: {}]
  %s7 = inlined_call_operand.vmem [shape: bf16[128,128], index: 7, kind: input, shape index: {}]
  %s8 = inlined_call_operand.vmem [shape: f32[1,128], index: 8, kind: input, shape index: {}]
  %s9 = inlined_call_operand.vmem [shape: f32[256,128], index: 9, kind: output, shape index: {}]
  %s10 = sld [smem:[#allocation0]]
  $region46: #{_fused_forward.1} parent=0
    _
  %s12 = ssub.s32 1, %s10
  %s13 = scalar_select 0, %s12, %s10
  // Predicated region
  $region2: #{_fused_forward.1} parent=0 // pred_check
    _
  $region3: #{_fused_forward.1} parent=0 // pred_check_branch
    %15 = sbr.rel (0) target = $region5
  $region4: #{_fused_forward.1} parent=0 // pred_region
    _
  $region5: #{_fused_forward.1} parent=0 // pred_fallthru
    _
  // Predicated region
  $region6: #{_fused_forward.1} parent=0 // pred_check
    _
  $region7: #{_fused_forward.1} parent=0 // pred_check_branch
    %17 = sbr.rel (0) target = $region9
  $region8: #{_fused_forward.1} parent=0 // pred_region
    _
  $region9: #{_fused_forward.1} parent=0 // pred_fallthru
    _
  // Predicated region
  $region10: #{_fused_forward.1} parent=0 // pred_check
    _
  $region11: #{_fused_forward.1} parent=0 // pred_check_branch
    %19 = sbr.rel (0) target = $region13
  $region12: #{_fused_forward.1} parent=0 // pred_region
    _
  $region13: #{_fused_forward.1} parent=0 // pred_fallthru
    _
  // Predicated region
  $region14: #{_fused_forward.1} parent=0 // pred_check
    _
  $region15: #{_fused_forward.1} parent=0 // pred_check_branch
    %21 = sbr.rel (0) target = $region17
  $region16: #{_fused_forward.1} parent=0 // pred_region
    _
  $region17: #{_fused_forward.1} parent=0 // pred_fallthru
    _
  // Predicated region
  $region18: #{_fused_forward.1} parent=0 // pred_check
    _
  $region19: #{_fused_forward.1} parent=0 // pred_check_branch
    %23 = sbr.rel (0) target = $region21
  $region20: #{_fused_forward.1} parent=0 // pred_region
    _
  $region21: #{_fused_forward.1} parent=0 // pred_fallthru
    _
  // Predicated region
  $region22: #{_fused_forward.1} parent=0 // pred_check
    _
  $region23: #{_fused_forward.1} parent=0 // pred_check_branch
    %25 = sbr.rel (0) target = $region25
  $region24: #{_fused_forward.1} parent=0 // pred_region
    _
  $region25: #{_fused_forward.1} parent=0 // pred_fallthru
    _
  // Predicated region
  $region26: #{_fused_forward.1} parent=0 // pred_check
    _
  $region27: #{_fused_forward.1} parent=0 // pred_check_branch
    %27 = sbr.rel (0) target = $region29
  $region28: #{_fused_forward.1} parent=0 // pred_region
    _
  $region29: #{_fused_forward.1} parent=0 // pred_fallthru
    _
  // Predicated region
  $region30: #{_fused_forward.1} parent=0 // pred_check
    _
  $region31: #{_fused_forward.1} parent=0 // pred_check_branch
    %29 = sbr.rel (0) target = $region33
  $region32: #{_fused_forward.1} parent=0 // pred_region
    _
  $region33: #{_fused_forward.1} parent=0 // pred_fallthru
    _
  // Predicated region
  $region34: #{_fused_forward.1} parent=0 // pred_check
    _
  $region35: #{_fused_forward.1} parent=0 // pred_check_branch
    %31 = sbr.rel (0) target = $region37
  $region36: #{_fused_forward.1} parent=0 // pred_region
    _
  $region37: #{_fused_forward.1} parent=0 // pred_fallthru
    _
  %v33 = vld [vmem:[%s0] sm:$0xff]
  %v34 = vld [vmem:[%s0 + $0x8] sm:$0xff]
  %v35 = vld [vmem:[%s0 + $0x10] sm:$0xff]
  %v36 = vld [vmem:[%s0 + $0x18] sm:$0xff]
  %v37 = vld [vmem:[%s0 + $0x20] sm:$0xff]
  %v38 = vld [vmem:[%s0 + $0x28] sm:$0xff]
  %v39 = vld [vmem:[%s0 + $0x30] sm:$0xff]
  %v40 = vld [vmem:[%s0 + $0x38] sm:$0xff]
  %v41 = vld [vmem:[%s0 + $0x40] sm:$0xff]
  %v42 = vld [vmem:[%s0 + $0x48] sm:$0xff]
  %v43 = vld [vmem:[%s0 + $0x50] sm:$0xff]
  %v44 = vld [vmem:[%s0 + $0x58] sm:$0xff]
  %v45 = vld [vmem:[%s0 + $0x60] sm:$0xff]
  %v46 = vld [vmem:[%s0 + $0x68] sm:$0xff]
  %v47 = vld [vmem:[%s0 + $0x70] sm:$0xff]
  %v48 = vld [vmem:[%s0 + $0x78] sm:$0xff]
  %v49 = vld [vmem:[%s0 + $0x80] sm:$0xff]
  %v50 = vld [vmem:[%s0 + $0x88] sm:$0xff]
  %v51 = vld [vmem:[%s0 + $0x90] sm:$0xff]
  %v52 = vld [vmem:[%s0 + $0x98] sm:$0xff]
  %v53 = vld [vmem:[%s0 + $0xa0] sm:$0xff]
  %v54 = vld [vmem:[%s0 + $0xa8] sm:$0xff]
  %v55 = vld [vmem:[%s0 + $0xb0] sm:$0xff]
  %v56 = vld [vmem:[%s0 + $0xb8] sm:$0xff]
  %v57 = vld [vmem:[%s0 + $0xc0] sm:$0xff]
  %v58 = vld [vmem:[%s0 + $0xc8] sm:$0xff]
  %v59 = vld [vmem:[%s0 + $0xd0] sm:$0xff]
  %v60 = vld [vmem:[%s0 + $0xd8] sm:$0xff]
  %v61 = vld [vmem:[%s0 + $0xe0] sm:$0xff]
  %v62 = vld [vmem:[%s0 + $0xe8] sm:$0xff]
  %v63 = vld [vmem:[%s0 + $0xf0] sm:$0xff]
  %v64 = vld [vmem:[%s0 + $0xf8] sm:$0xff]
  %v65 = vld [vmem:[%s1] sm:$0xf]
  %v66 = vld [vmem:[%s1 + $0x4] sm:$0xf]
  %v67 = vld [vmem:[%s1 + $0x8] sm:$0xf]
  %v68 = vld [vmem:[%s1 + $0xc] sm:$0xf]
  %v69 = vpack.c.bf16 %v34, %v33
  %v70 = vpack.c.bf16 %v36, %v35
  %v71 = vpack.c.bf16 %v38, %v37
  %v72 = vpack.c.bf16 %v40, %v39
  %v73 = vpack.c.bf16 %v42, %v41
  %v74 = vpack.c.bf16 %v44, %v43
  %v75 = vpack.c.bf16 %v46, %v45
  %v76 = vpack.c.bf16 %v48, %v47
  %v77 = vpack.c.bf16 %v50, %v49
  %v78 = vpack.c.bf16 %v52, %v51
  %v79 = vpack.c.bf16 %v54, %v53
  %v80 = vpack.c.bf16 %v56, %v55
  %v81 = vpack.c.bf16 %v58, %v57
  %v82 = vpack.c.bf16 %v60, %v59
  %v83 = vpack.c.bf16 %v62, %v61
  %v84 = vpack.c.bf16 %v64, %v63
  %v89 = vunpack.c.l.b16 %v65
  %v90 = vunpack.c.l.b16 %v66
  %v91 = vunpack.c.l.b16 %v67
  %v92 = vunpack.c.l.b16 %v68
  %v93 = vpack.c.b16 %v90, %v89
  %v94 = vpack.c.b16 %v92, %v91
  %vm97 = vcmask 261120
  %v99 = vsel %vm97, %v69, 0
  %v102 = vsel %vm97, %v70, 0
  %v105 = vsel %vm97, %v71, 0
  %v108 = vsel %vm97, %v72, 0
  %v111 = vsel %vm97, %v73, 0
  %v114 = vsel %vm97, %v74, 0
  %v117 = vsel %vm97, %v75, 0
  %v120 = vsel %vm97, %v76, 0
  %v123 = vsel %vm97, %v77, 0
  %v126 = vsel %vm97, %v78, 0
  %v129 = vsel %vm97, %v79, 0
  %v132 = vsel %vm97, %v80, 0
  %v135 = vsel %vm97, %v81, 0
  %v138 = vsel %vm97, %v82, 0
  %v141 = vsel %vm97, %v83, 0
  %v144 = vsel %vm97, %v84, 0
  %146 = vmatprep.subr.bf16.mxu0 0
  %147 = vmatpush1.bf16.msra.mxu0 %v93
  %148 = vmatprep.subr.bf16.mxu0 0
  %149 = vmatpush1.bf16.msra.mxu0 %v94
  %150 = vmatprep.subr.bf16.mxu0 0
  %151 = vmatpush1.bf16.msra.mxu0 0
  %152 = vmatprep.subr.bf16.mxu0 0
  %153 = vmatpush1.bf16.msra.mxu0 0
  %154 = vmatprep.subr.bf16.mxu0 0
  %155 = vmatpush1.bf16.msra.mxu0 0
  %156 = vmatprep.subr.bf16.mxu0 0
  %157 = vmatpush1.bf16.msra.mxu0 0
  %158 = vmatprep.subr.bf16.mxu0 0
  %159 = vmatpush1.bf16.msra.mxu0 0
  %160 = vmatprep.subr.bf16.mxu0 0
  %161 = vmatpush1.bf16.msra.mxu0 0
  %162 = vmatprep.subr.bf16.mxu0 0
  %163 = vmatpush1.bf16.msra.mxu0 0
  %164 = vmatprep.subr.bf16.mxu0 0
  %165 = vmatpush1.bf16.msra.mxu0 0
  %166 = vmatprep.subr.bf16.mxu0 0
  %167 = vmatpush1.bf16.msra.mxu0 0
  %168 = vmatprep.subr.bf16.mxu0 0
  %169 = vmatpush1.bf16.msra.mxu0 0
  %170 = vmatprep.subr.bf16.mxu0 0
  %171 = vmatpush1.bf16.msra.mxu0 0
  %172 = vmatprep.subr.bf16.mxu0 0
  %173 = vmatpush1.bf16.msra.mxu0 0
  %174 = vmatprep.subr.bf16.mxu0 0
  %175 = vmatpush1.bf16.msra.mxu0 0
  %176 = vmatprep.subr.bf16.mxu0 0
  %177 = vmatpush1.bf16.msra.mxu0 0
  %178 = vmatprep.mubr.bf16.mxu0 0
  %179 = vmatmul.mubr.bf16.gmra.mrb[0].mxu0 %v99
  %v180 = vpop.f32.mrb[0].mxu0
  %v181 = vadd.f32 0.0, %v180
  %v182 = vpop.f32.mrb[0].mxu0
  %v183 = vpop.f32.mrb[0].mxu0
  %v184 = vadd.f32 0.0, %v183
  %v185 = vpop.f32.mrb[0].mxu0
  %186 = vmatprep.mubr.bf16.mxu0 0
  %187 = vmatmul.mubr.bf16.gmra.mrb[0].mxu0 %v102
  %v188 = vpop.f32.mrb[0].mxu0
  %v189 = vadd.f32 0.0, %v188
  %v190 = vpop.f32.mrb[0].mxu0
  %v191 = vpop.f32.mrb[0].mxu0
  %v192 = vadd.f32 0.0, %v191
  %v193 = vpop.f32.mrb[0].mxu0
  %194 = vmatprep.mubr.bf16.mxu0 0
  %195 = vmatmul.mubr.bf16.gmra.mrb[0].mxu0 %v105
  %v196 = vpop.f32.mrb[0].mxu0
  %v197 = vadd.f32 0.0, %v196
  %v198 = vpop.f32.mrb[0].mxu0
  %v199 = vpop.f32.mrb[0].mxu0
  %v200 = vadd.f32 0.0, %v199
  %v201 = vpop.f32.mrb[0].mxu0
  %202 = vmatprep.mubr.bf16.mxu0 0
  %203 = vmatmul.mubr.bf16.gmra.mrb[0].mxu0 %v108
  %v204 = vpop.f32.mrb[0].mxu0
  %v205 = vadd.f32 0.0, %v204
  %v206 = vpop.f32.mrb[0].mxu0
  %v207 = vpop.f32.mrb[0].mxu0
  %v208 = vadd.f32 0.0, %v207
  %v209 = vpop.f32.mrb[0].mxu0
  %210 = vmatprep.mubr.bf16.mxu0 0
  %211 = vmatmul.mubr.bf16.gmra.mrb[0].mxu0 %v111
  %v212 = vpop.f32.mrb[0].mxu0
  %v213 = vadd.f32 0.0, %v212
  %v214 = vpop.f32.mrb[0].mxu0
  %v215 = vpop.f32.mrb[0].mxu0
  %v216 = vadd.f32 0.0, %v215
  %v217 = vpop.f32.mrb[0].mxu0
  %218 = vmatprep.mubr.bf16.mxu0 0
  %219 = vmatmul.mubr.bf16.gmra.mrb[0].mxu0 %v114
  %v220 = vpop.f32.mrb[0].mxu0
  %v221 = vadd.f32 0.0, %v220
  %v222 = vpop.f32.mrb[0].mxu0
  %v223 = vpop.f32.mrb[0].mxu0
  %v224 = vadd.f32 0.0, %v223
  %v225 = vpop.f32.mrb[0].mxu0
  %226 = vmatprep.mubr.bf16.mxu0 0
  %227 = vmatmul.mubr.bf16.gmra.mrb[0].mxu0 %v117
  %v228 = vpop.f32.mrb[0].mxu0
  %v229 = vadd.f32 0.0, %v228
  %v230 = vpop.f32.mrb[0].mxu0
  %v231 = vpop.f32.mrb[0].mxu0
  %v232 = vadd.f32 0.0, %v231
  %v233 = vpop.f32.mrb[0].mxu0
  %234 = vmatprep.mubr.bf16.mxu0 0
  %235 = vmatmul.mubr.bf16.gmra.mrb[0].mxu0 %v120
  %v236 = vpop.f32.mrb[0].mxu0
  %v237 = vadd.f32 0.0, %v236
  %v238 = vpop.f32.mrb[0].mxu0
  %v239 = vpop.f32.mrb[0].mxu0
  %v240 = vadd.f32 0.0, %v239
  %v241 = vpop.f32.mrb[0].mxu0
  %242 = vmatprep.mubr.bf16.mxu0 0
  %243 = vmatmul.mubr.bf16.gmra.mrb[0].mxu0 %v123
  %v244 = vpop.f32.mrb[0].mxu0
  %v245 = vadd.f32 0.0, %v244
  %v246 = vpop.f32.mrb[0].mxu0
  %v247 = vpop.f32.mrb[0].mxu0
  %v248 = vadd.f32 0.0, %v247
  %v249 = vpop.f32.mrb[0].mxu0
  %250 = vmatprep.mubr.bf16.mxu0 0
  %251 = vmatmul.mubr.bf16.gmra.mrb[0].mxu0 %v126
  %v252 = vpop.f32.mrb[0].mxu0
  %v253 = vadd.f32 0.0, %v252
  %v254 = vpop.f32.mrb[0].mxu0
  %v255 = vpop.f32.mrb[0].mxu0
  %v256 = vadd.f32 0.0, %v255
  %v257 = vpop.f32.mrb[0].mxu0
  %258 = vmatprep.mubr.bf16.mxu0 0
  %259 = vmatmul.mubr.bf16.gmra.mrb[0].mxu0 %v129
  %v260 = vpop.f32.mrb[0].mxu0
  %v261 = vadd.f32 0.0, %v260
  %v262 = vpop.f32.mrb[0].mxu0
  %v263 = vpop.f32.mrb[0].mxu0
  %v264 = vadd.f32 0.0, %v263
  %v265 = vpop.f32.mrb[0].mxu0
  %266 = vmatprep.mubr.bf16.mxu0 0
  %267 = vmatmul.mubr.bf16.gmra.mrb[0].mxu0 %v132
  %v268 = vpop.f32.mrb[0].mxu0
  %v269 = vadd.f32 0.0, %v268
  %v270 = vpop.f32.mrb[0].mxu0
  %v271 = vpop.f32.mrb[0].mxu0
  %v272 = vadd.f32 0.0, %v271
  %v273 = vpop.f32.mrb[0].mxu0
  %274 = vmatprep.mubr.bf16.mxu0 0
  %275 = vmatmul.mubr.bf16.gmra.mrb[0].mxu0 %v135
  %v276 = vpop.f32.mrb[0].mxu0
  %v277 = vadd.f32 0.0, %v276
  %v278 = vpop.f32.mrb[0].mxu0
  %v279 = vpop.f32.mrb[0].mxu0
  %v280 = vadd.f32 0.0, %v279
  %v281 = vpop.f32.mrb[0].mxu0
  %282 = vmatprep.mubr.bf16.mxu0 0
  %283 = vmatmul.mubr.bf16.gmra.mrb[0].mxu0 %v138
  %v284 = vpop.f32.mrb[0].mxu0
  %v285 = vadd.f32 0.0, %v284
  %v286 = vpop.f32.mrb[0].mxu0
  %v287 = vpop.f32.mrb[0].mxu0
  %v288 = vadd.f32 0.0, %v287
  %v289 = vpop.f32.mrb[0].mxu0
  %290 = vmatprep.mubr.bf16.mxu0 0
  %291 = vmatmul.mubr.bf16.gmra.mrb[0].mxu0 %v141
  %v292 = vpop.f32.mrb[0].mxu0
  %v293 = vadd.f32 0.0, %v292
  %v294 = vpop.f32.mrb[0].mxu0
  %v295 = vpop.f32.mrb[0].mxu0
  %v296 = vadd.f32 0.0, %v295
  %v297 = vpop.f32.mrb[0].mxu0
  %298 = vmatprep.mubr.bf16.mxu0 0
  %299 = vmatmul.mubr.bf16.gmra.mrb[0].mxu0 %v144
  %v300 = vpop.f32.mrb[0].mxu0
  %v301 = vadd.f32 0.0, %v300
  %v302 = vpop.f32.mrb[0].mxu0
  %v303 = vpop.f32.mrb[0].mxu0
  %v304 = vadd.f32 0.0, %v303
  %v305 = vpop.f32.mrb[0].mxu0
  %306 = vdwg.mxu0
  %v307 = vadd.f32 %v181, %v184
  %v308 = vadd.f32 %v307, %v189
  %v309 = vadd.f32 %v308, %v192
  %v310 = vadd.f32 %v309, %v197
  %v311 = vadd.f32 %v310, %v200
  %v312 = vadd.f32 %v311, %v205
  %v313 = vadd.f32 %v312, %v208
  %v314 = vadd.f32 %v313, %v213
  %v315 = vadd.f32 %v314, %v216
  %v316 = vadd.f32 %v315, %v221
  %v317 = vadd.f32 %v316, %v224
  %v318 = vadd.f32 %v317, %v229
  %v319 = vadd.f32 %v318, %v232
  %v320 = vadd.f32 %v319, %v237
  %v321 = vadd.f32 %v320, %v240
  %v322 = vadd.f32 %v321, %v245
  %v323 = vadd.f32 %v322, %v248
  %v324 = vadd.f32 %v323, %v253
  %v325 = vadd.f32 %v324, %v256
  %v326 = vadd.f32 %v325, %v261
  %v327 = vadd.f32 %v326, %v264
  %v328 = vadd.f32 %v327, %v269
  %v329 = vadd.f32 %v328, %v272
  %v330 = vadd.f32 %v329, %v277
  %v331 = vadd.f32 %v330, %v280
  %v332 = vadd.f32 %v331, %v285
  %v333 = vadd.f32 %v332, %v288
  %v334 = vadd.f32 %v333, %v293
  %v335 = vadd.f32 %v334, %v296
  %v336 = vadd.f32 %v335, %v301
  %v337 = vadd.f32 %v336, %v304
  %v338 = vrot.slane %v337, 4
  %v339 = vadd.f32 %v337, %v338
  %v340 = vrot.slane %v339, 2
  %v341 = vadd.f32 %v339, %v340
  %v342 = vrot.slane %v341, 1
  %v343 = vadd.f32 %v341, %v342
  %v344 = vrcp.pop 256.0
  %v345 = vmul.f32 %v343, %v344
  %v346 = vmul.f32 %v181, %v181
  %v347 = vmul.f32 %v184, %v184
  %v348 = vmul.f32 %v189, %v189
  %v349 = vmul.f32 %v192, %v192
  %v350 = vmul.f32 %v197, %v197
  %v351 = vmul.f32 %v200, %v200
  %v352 = vmul.f32 %v205, %v205
  %v353 = vmul.f32 %v208, %v208
  %v354 = vmul.f32 %v213, %v213
  %v355 = vmul.f32 %v216, %v216
  %v356 = vmul.f32 %v221, %v221
  %v357 = vmul.f32 %v224, %v224
  %v358 = vmul.f32 %v229, %v229
  %v359 = vmul.f32 %v232, %v232
  %v360 = vmul.f32 %v237, %v237
  %v361 = vmul.f32 %v240, %v240
  %v362 = vmul.f32 %v245, %v245
  %v363 = vmul.f32 %v248, %v248
  %v364 = vmul.f32 %v253, %v253
  %v365 = vmul.f32 %v256, %v256
  %v366 = vmul.f32 %v261, %v261
  %v367 = vmul.f32 %v264, %v264
  %v368 = vmul.f32 %v269, %v269
  %v369 = vmul.f32 %v272, %v272
  %v370 = vmul.f32 %v277, %v277
  %v371 = vmul.f32 %v280, %v280
  %v372 = vmul.f32 %v285, %v285
  %v373 = vmul.f32 %v288, %v288
  %v374 = vmul.f32 %v293, %v293
  %v375 = vmul.f32 %v296, %v296
  %v376 = vmul.f32 %v301, %v301
  %v377 = vmul.f32 %v304, %v304
  %v378 = vadd.f32 %v346, %v347
  %v379 = vadd.f32 %v378, %v348
  %v380 = vadd.f32 %v379, %v349
  %v381 = vadd.f32 %v380, %v350
  %v382 = vadd.f32 %v381, %v351
  %v383 = vadd.f32 %v382, %v352
  %v384 = vadd.f32 %v383, %v353
  %v385 = vadd.f32 %v384, %v354
  %v386 = vadd.f32 %v385, %v355
  %v387 = vadd.f32 %v386, %v356
  %v388 = vadd.f32 %v387, %v357
  %v389 = vadd.f32 %v388, %v358
  %v390 = vadd.f32 %v389, %v359
  %v391 = vadd.f32 %v390, %v360
  %v392 = vadd.f32 %v391, %v361
  %v393 = vadd.f32 %v392, %v362
  %v394 = vadd.f32 %v393, %v363
  %v395 = vadd.f32 %v394, %v364
  %v396 = vadd.f32 %v395, %v365
  %v397 = vadd.f32 %v396, %v366
  %v398 = vadd.f32 %v397, %v367
  %v399 = vadd.f32 %v398, %v368
  %v400 = vadd.f32 %v399, %v369
  %v401 = vadd.f32 %v400, %v370
  %v402 = vadd.f32 %v401, %v371
  %v403 = vadd.f32 %v402, %v372
  %v404 = vadd.f32 %v403, %v373
  %v405 = vadd.f32 %v404, %v374
  %v406 = vadd.f32 %v405, %v375
  %v407 = vadd.f32 %v406, %v376
  %v408 = vadd.f32 %v407, %v377
  %v409 = vrot.slane %v408, 4
  %v410 = vadd.f32 %v408, %v409
  %v411 = vrot.slane %v410, 2
  %v412 = vadd.f32 %v410, %v411
  %v413 = vrot.slane %v412, 1
  %v414 = vadd.f32 %v412, %v413
  %v415 = vmul.f32 %v414, %v344
  %v416 = vmul.f32 %v345, %v345
  %v417 = vsub.f32 %v415, %v416
  %v418 = vadd.f32 %v417, 1e-05
  %v419 = vrsqrt.pop %v418
  %v420 = vld [vmem:[%s2] sm:$0x1]
  %v421 = vmul.f32 %v419, %v420
  %v422 = vld [vmem:[%s3] sm:$0x1]
  %v423 = vmul.f32 %v345, %v421
  %v424 = vsub.f32 %v422, %v423
  %v425 = vlaneseq
  %v426 = vshrl.u32 %v425, 7
  %v427 = vsub.s32 0, %v426
  %v428 = vrot.slane %v421, %v427
  %v429 = vmul.f32 %v181, %v428
  %v430 = vmul.f32 %v184, %v428
  %v431 = vmul.f32 %v189, %v428
  %v432 = vmul.f32 %v192, %v428
  %v433 = vmul.f32 %v197, %v428
  %v434 = vmul.f32 %v200, %v428
  %v435 = vmul.f32 %v205, %v428
  %v436 = vmul.f32 %v208, %v428
  %v437 = vmul.f32 %v213, %v428
  %v438 = vmul.f32 %v216, %v428
  %v439 = vmul.f32 %v221, %v428
  %v440 = vmul.f32 %v224, %v428
  %v441 = vmul.f32 %v229, %v428
  %v442 = vmul.f32 %v232, %v428
  %v443 = vmul.f32 %v237, %v428
  %v444 = vmul.f32 %v240, %v428
  %v445 = vmul.f32 %v245, %v428
  %v446 = vmul.f32 %v248, %v428
  %v447 = vmul.f32 %v253, %v428
  %v448 = vmul.f32 %v256, %v428
  %v449 = vmul.f32 %v261, %v428
  %v450 = vmul.f32 %v264, %v428
  %v451 = vmul.f32 %v269, %v428
  %v452 = vmul.f32 %v272, %v428
  %v453 = vmul.f32 %v277, %v428
  %v454 = vmul.f32 %v280, %v428
  %v455 = vmul.f32 %v285, %v428
  %v456 = vmul.f32 %v288, %v428
  %v457 = vmul.f32 %v293, %v428
  %v458 = vmul.f32 %v296, %v428
  %v459 = vmul.f32 %v301, %v428
  %v460 = vmul.f32 %v304, %v428
  %v462 = vlaneseq
  %v463 = vshrl.u32 %v462, 7
  %v464 = vsub.s32 0, %v463
  %v465 = vrot.slane %v424, %v464
  %v467 = vadd.f32 %v429, %v465
  %v468 = vadd.f32 %v430, %v465
  %v469 = vadd.f32 %v431, %v465
  %v470 = vadd.f32 %v432, %v465
  %v471 = vadd.f32 %v433, %v465
  %v472 = vadd.f32 %v434, %v465
  %v473 = vadd.f32 %v435, %v465
  %v474 = vadd.f32 %v436, %v465
  %v475 = vadd.f32 %v437, %v465
  %v476 = vadd.f32 %v438, %v465
  %v477 = vadd.f32 %v439, %v465
  %v478 = vadd.f32 %v440, %v465
  %v479 = vadd.f32 %v441, %v465
  %v480 = vadd.f32 %v442, %v465
  %v481 = vadd.f32 %v443, %v465
  %v482 = vadd.f32 %v444, %v465
  %v483 = vadd.f32 %v445, %v465
  %v484 = vadd.f32 %v446, %v465
  %v485 = vadd.f32 %v447, %v465
  %v486 = vadd.f32 %v448, %v465
  %v487 = vadd.f32 %v449, %v465
  %v488 = vadd.f32 %v450, %v465
  %v489 = vadd.f32 %v451, %v465
  %v490 = vadd.f32 %v452, %v465
  %v491 = vadd.f32 %v453, %v465
  %v492 = vadd.f32 %v454, %v465
  %v493 = vadd.f32 %v455, %v465
  %v494 = vadd.f32 %v456, %v465
  %v495 = vadd.f32 %v457, %v465
  %v496 = vadd.f32 %v458, %v465
  %v497 = vadd.f32 %v459, %v465
  %v498 = vadd.f32 %v460, %v465
  %v499 = vmax.f32 %v467, 0.0
  %v500 = vmax.f32 %v468, 0.0
  %v501 = vmax.f32 %v469, 0.0
  %v502 = vmax.f32 %v470, 0.0
  %v503 = vmax.f32 %v471, 0.0
  %v504 = vmax.f32 %v472, 0.0
  %v505 = vmax.f32 %v473, 0.0
  %v506 = vmax.f32 %v474, 0.0
  %v507 = vmax.f32 %v475, 0.0
  %v508 = vmax.f32 %v476, 0.0
  %v509 = vmax.f32 %v477, 0.0
  %v510 = vmax.f32 %v478, 0.0
  %v511 = vmax.f32 %v479, 0.0
  %v512 = vmax.f32 %v480, 0.0
  %v513 = vmax.f32 %v481, 0.0
  %v514 = vmax.f32 %v482, 0.0
  %v515 = vmax.f32 %v483, 0.0
  %v516 = vmax.f32 %v484, 0.0
  %v517 = vmax.f32 %v485, 0.0
  %v518 = vmax.f32 %v486, 0.0
  %v519 = vmax.f32 %v487, 0.0
  %v520 = vmax.f32 %v488, 0.0
  %v521 = vmax.f32 %v489, 0.0
  %v522 = vmax.f32 %v490, 0.0
  %v523 = vmax.f32 %v491, 0.0
  %v524 = vmax.f32 %v492, 0.0
  %v525 = vmax.f32 %v493, 0.0
  %v526 = vmax.f32 %v494, 0.0
  %v527 = vmax.f32 %v495, 0.0
  %v528 = vmax.f32 %v496, 0.0
  %v529 = vmax.f32 %v497, 0.0
  %v530 = vmax.f32 %v498, 0.0
  %v531 = vld [vmem:[%s4] sm:$0xf]
  %v532 = vld [vmem:[%s4 + $0x4] sm:$0xf]
  %v533 = vld [vmem:[%s4 + $0x8] sm:$0xf]
  %v534 = vld [vmem:[%s4 + $0xc] sm:$0xf]
  %v535 = vld [vmem:[%s4 + $0x10] sm:$0xf]
  %v536 = vld [vmem:[%s4 + $0x14] sm:$0xf]
  %v537 = vld [vmem:[%s4 + $0x18] sm:$0xf]
  %v538 = vld [vmem:[%s4 + $0x1c] sm:$0xf]
  %v539 = vld [vmem:[%s4 + $0x20] sm:$0xf]
  %v540 = vld [vmem:[%s4 + $0x24] sm:$0xf]
  %v541 = vld [vmem:[%s4 + $0x28] sm:$0xf]
  %v542 = vld [vmem:[%s4 + $0x2c] sm:$0xf]
  %v543 = vld [vmem:[%s4 + $0x30] sm:$0xf]
  %v544 = vld [vmem:[%s4 + $0x34] sm:$0xf]
  %v545 = vld [vmem:[%s4 + $0x38] sm:$0xf]
  %v546 = vld [vmem:[%s4 + $0x3c] sm:$0xf]
  %v547 = vpack.c.bf16 %v500, %v499
  %v548 = vpack.c.bf16 %v502, %v501
  %v549 = vpack.c.bf16 %v504, %v503
  %v550 = vpack.c.bf16 %v506, %v505
  %v551 = vpack.c.bf16 %v508, %v507
  %v552 = vpack.c.bf16 %v510, %v509
  %v553 = vpack.c.bf16 %v512, %v511
  %v554 = vpack.c.bf16 %v514, %v513
  %v555 = vpack.c.bf16 %v516, %v515
  %v556 = vpack.c.bf16 %v518, %v517
  %v557 = vpack.c.bf16 %v520, %v519
  %v558 = vpack.c.bf16 %v522, %v521
  %v559 = vpack.c.bf16 %v524, %v523
  %v560 = vpack.c.bf16 %v526, %v525
  %v561 = vpack.c.bf16 %v528, %v527
  %v562 = vpack.c.bf16 %v530, %v529
  %v579 = vunpack.c.l.b16 %v531
  %v580 = vunpack.c.l.b16 %v532
  %v581 = vunpack.c.l.b16 %v533
  %v582 = vunpack.c.l.b16 %v534
  %v583 = vunpack.c.l.b16 %v535
  %v584 = vunpack.c.l.b16 %v536
  %v585 = vunpack.c.l.b16 %v537
  %v586 = vunpack.c.l.b16 %v538
  %v587 = vunpack.c.l.b16 %v539
  %v588 = vunpack.c.l.b16 %v540
  %v589 = vunpack.c.l.b16 %v541
  %v590 = vunpack.c.l.b16 %v542
  %v591 = vunpack.c.l.b16 %v543
  %v592 = vunpack.c.l.b16 %v544
  %v593 = vunpack.c.l.b16 %v545
  %v594 = vunpack.c.l.b16 %v546
  %v595 = vpack.c.b16 %v580, %v579
  %v596 = vpack.c.b16 %v582, %v581
  %v597 = vpack.c.b16 %v584, %v583
  %v598 = vpack.c.b16 %v586, %v585
  %v599 = vpack.c.b16 %v588, %v587
  %v600 = vpack.c.b16 %v590, %v589
  %v601 = vpack.c.b16 %v592, %v591
  %v602 = vpack.c.b16 %v594, %v593
  %611 = vmatprep.subr.bf16.mxu0 0
  %612 = vmatpush1.bf16.msra.mxu0 %v595
  %613 = vmatprep.subr.bf16.mxu0 0
  %614 = vmatpush1.bf16.msra.mxu0 %v596
  %615 = vmatprep.subr.bf16.mxu0 0
  %616 = vmatpush1.bf16.msra.mxu0 %v597
  %617 = vmatprep.subr.bf16.mxu0 0
  %618 = vmatpush1.bf16.msra.mxu0 %v598
  %619 = vmatprep.subr.bf16.mxu0 0
  %620 = vmatpush1.bf16.msra.mxu0 %v599
  %621 = vmatprep.subr.bf16.mxu0 0
  %622 = vmatpush1.bf16.msra.mxu0 %v600
  %623 = vmatprep.subr.bf16.mxu0 0
  %624 = vmatpush1.bf16.msra.mxu0 %v601
  %625 = vmatprep.subr.bf16.mxu0 0
  %626 = vmatpush1.bf16.msra.mxu0 %v602
  %627 = vmatprep.subr.bf16.mxu0 0
  %628 = vmatpush1.bf16.msra.mxu0 0
  %629 = vmatprep.subr.bf16.mxu0 0
  %630 = vmatpush1.bf16.msra.mxu0 0
  %631 = vmatprep.subr.bf16.mxu0 0
  %632 = vmatpush1.bf16.msra.mxu0 0
  %633 = vmatprep.subr.bf16.mxu0 0
  %634 = vmatpush1.bf16.msra.mxu0 0
  %635 = vmatprep.subr.bf16.mxu0 0
  %636 = vmatpush1.bf16.msra.mxu0 0
  %637 = vmatprep.subr.bf16.mxu0 0
  %638 = vmatpush1.bf16.msra.mxu0 0
  %639 = vmatprep.subr.bf16.mxu0 0
  %640 = vmatpush1.bf16.msra.mxu0 0
  %641 = vmatprep.subr.bf16.mxu0 0
  %642 = vmatpush1.bf16.msra.mxu0 0
  %643 = vmatprep.mubr.bf16.mxu0 0
  %644 = vmatmul.mubr.bf16.gmra.mrb[0].mxu0 %v547
  %v645 = vpop.f32.mrb[0].mxu0
  %v646 = vadd.f32 0.0, %v645
  %v647 = vpop.f32.mrb[0].mxu0
  %v648 = vpop.f32.mrb[0].mxu0
  %v649 = vadd.f32 0.0, %v648
  %v650 = vpop.f32.mrb[0].mxu0
  %651 = vmatprep.mubr.bf16.mxu0 0
  %652 = vmatmul.mubr.bf16.gmra.mrb[0].mxu0 %v548
  %v653 = vpop.f32.mrb[0].mxu0
  %v654 = vadd.f32 0.0, %v653
  %v655 = vpop.f32.mrb[0].mxu0
  %v656 = vpop.f32.mrb[0].mxu0
  %v657 = vadd.f32 0.0, %v656
  %v658 = vpop.f32.mrb[0].mxu0
  %659 = vmatprep.mubr.bf16.mxu0 0
  %660 = vmatmul.mubr.bf16.gmra.mrb[0].mxu0 %v549
  %v661 = vpop.f32.mrb[0].mxu0
  %v662 = vadd.f32 0.0, %v661
  %v663 = vpop.f32.mrb[0].mxu0
  %v664 = vpop.f32.mrb[0].mxu0
  %v665 = vadd.f32 0.0, %v664
  %v666 = vpop.f32.mrb[0].mxu0
  %667 = vmatprep.mubr.bf16.mxu0 0
  %668 = vmatmul.mubr.bf16.gmra.mrb[0].mxu0 %v550
  %v669 = vpop.f32.mrb[0].mxu0
  %v670 = vadd.f32 0.0, %v669
  %v671 = vpop.f32.mrb[0].mxu0
  %v672 = vpop.f32.mrb[0].mxu0
  %v673 = vadd.f32 0.0, %v672
  %v674 = vpop.f32.mrb[0].mxu0
  %675 = vmatprep.mubr.bf16.mxu0 0
  %676 = vmatmul.mubr.bf16.gmra.mrb[0].mxu0 %v551
  %v677 = vpop.f32.mrb[0].mxu0
  %v678 = vadd.f32 0.0, %v677
  %v679 = vpop.f32.mrb[0].mxu0
  %v680 = vpop.f32.mrb[0].mxu0
  %v681 = vadd.f32 0.0, %v680
  %v682 = vpop.f32.mrb[0].mxu0
  %683 = vmatprep.mubr.bf16.mxu0 0
  %684 = vmatmul.mubr.bf16.gmra.mrb[0].mxu0 %v552
  %v685 = vpop.f32.mrb[0].mxu0
  %v686 = vadd.f32 0.0, %v685
  %v687 = vpop.f32.mrb[0].mxu0
  %v688 = vpop.f32.mrb[0].mxu0
  %v689 = vadd.f32 0.0, %v688
  %v690 = vpop.f32.mrb[0].mxu0
  %691 = vmatprep.mubr.bf16.mxu0 0
  %692 = vmatmul.mubr.bf16.gmra.mrb[0].mxu0 %v553
  %v693 = vpop.f32.mrb[0].mxu0
  %v694 = vadd.f32 0.0, %v693
  %v695 = vpop.f32.mrb[0].mxu0
  %v696 = vpop.f32.mrb[0].mxu0
  %v697 = vadd.f32 0.0, %v696
  %v698 = vpop.f32.mrb[0].mxu0
  %699 = vmatprep.mubr.bf16.mxu0 0
  %700 = vmatmul.mubr.bf16.gmra.mrb[0].mxu0 %v554
  %v701 = vpop.f32.mrb[0].mxu0
  %v702 = vadd.f32 0.0, %v701
  %v703 = vpop.f32.mrb[0].mxu0
  %v704 = vpop.f32.mrb[0].mxu0
  %v705 = vadd.f32 0.0, %v704
  %v706 = vpop.f32.mrb[0].mxu0
  %707 = vmatprep.mubr.bf16.mxu0 0
  %708 = vmatmul.mubr.bf16.gmra.mrb[0].mxu0 %v555
  %v709 = vpop.f32.mrb[0].mxu0
  %v710 = vadd.f32 0.0, %v709
  %v711 = vpop.f32.mrb[0].mxu0
  %v712 = vpop.f32.mrb[0].mxu0
  %v713 = vadd.f32 0.0, %v712
  %v714 = vpop.f32.mrb[0].mxu0
  %715 = vmatprep.mubr.bf16.mxu0 0
  %716 = vmatmul.mubr.bf16.gmra.mrb[0].mxu0 %v556
  %v717 = vpop.f32.mrb[0].mxu0
  %v718 = vadd.f32 0.0, %v717
  %v719 = vpop.f32.mrb[0].mxu0
  %v720 = vpop.f32.mrb[0].mxu0
  %v721 = vadd.f32 0.0, %v720
  %v722 = vpop.f32.mrb[0].mxu0
  %723 = vmatprep.mubr.bf16.mxu0 0
  %724 = vmatmul.mubr.bf16.gmra.mrb[0].mxu0 %v557
  %v725 = vpop.f32.mrb[0].mxu0
  %v726 = vadd.f32 0.0, %v725
  %v727 = vpop.f32.mrb[0].mxu0
  %v728 = vpop.f32.mrb[0].mxu0
  %v729 = vadd.f32 0.0, %v728
  %v730 = vpop.f32.mrb[0].mxu0
  %731 = vmatprep.mubr.bf16.mxu0 0
  %732 = vmatmul.mubr.bf16.gmra.mrb[0].mxu0 %v558
  %v733 = vpop.f32.mrb[0].mxu0
  %v734 = vadd.f32 0.0, %v733
  %v735 = vpop.f32.mrb[0].mxu0
  %v736 = vpop.f32.mrb[0].mxu0
  %v737 = vadd.f32 0.0, %v736
  %v738 = vpop.f32.mrb[0].mxu0
  %739 = vmatprep.mubr.bf16.mxu0 0
  %740 = vmatmul.mubr.bf16.gmra.mrb[0].mxu0 %v559
  %v741 = vpop.f32.mrb[0].mxu0
  %v742 = vadd.f32 0.0, %v741
  %v743 = vpop.f32.mrb[0].mxu0
  %v744 = vpop.f32.mrb[0].mxu0
  %v745 = vadd.f32 0.0, %v744
  %v746 = vpop.f32.mrb[0].mxu0
  %747 = vmatprep.mubr.bf16.mxu0 0
  %748 = vmatmul.mubr.bf16.gmra.mrb[0].mxu0 %v560
  %v749 = vpop.f32.mrb[0].mxu0
  %v750 = vadd.f32 0.0, %v749
  %v751 = vpop.f32.mrb[0].mxu0
  %v752 = vpop.f32.mrb[0].mxu0
  %v753 = vadd.f32 0.0, %v752
  %v754 = vpop.f32.mrb[0].mxu0
  %755 = vmatprep.mubr.bf16.mxu0 0
  %756 = vmatmul.mubr.bf16.gmra.mrb[0].mxu0 %v561
  %v757 = vpop.f32.mrb[0].mxu0
  %v758 = vadd.f32 0.0, %v757
  %v759 = vpop.f32.mrb[0].mxu0
  %v760 = vpop.f32.mrb[0].mxu0
  %v761 = vadd.f32 0.0, %v760
  %v762 = vpop.f32.mrb[0].mxu0
  %763 = vmatprep.mubr.bf16.mxu0 0
  %764 = vmatmul.mubr.bf16.gmra.mrb[0].mxu0 %v562
  %v765 = vpop.f32.mrb[0].mxu0
  %v766 = vadd.f32 0.0, %v765
  %v767 = vpop.f32.mrb[0].mxu0
  %v768 = vpop.f32.mrb[0].mxu0
  %v769 = vadd.f32 0.0, %v768
  %v770 = vpop.f32.mrb[0].mxu0
  %771 = vdwg.mxu0
  %v772 = vadd.f32 %v646, %v649
  %v773 = vadd.f32 %v772, %v654
  %v774 = vadd.f32 %v773, %v657
  %v775 = vadd.f32 %v774, %v662
  %v776 = vadd.f32 %v775, %v665
  %v777 = vadd.f32 %v776, %v670
  %v778 = vadd.f32 %v777, %v673
  %v779 = vadd.f32 %v778, %v678
  %v780 = vadd.f32 %v779, %v681
  %v781 = vadd.f32 %v780, %v686
  %v782 = vadd.f32 %v781, %v689
  %v783 = vadd.f32 %v782, %v694
  %v784 = vadd.f32 %v783, %v697
  %v785 = vadd.f32 %v784, %v702
  %v786 = vadd.f32 %v785, %v705
  %v787 = vadd.f32 %v786, %v710
  %v788 = vadd.f32 %v787, %v713
  %v789 = vadd.f32 %v788, %v718
  %v790 = vadd.f32 %v789, %v721
  %v791 = vadd.f32 %v790, %v726
  %v792 = vadd.f32 %v791, %v729
  %v793 = vadd.f32 %v792, %v734
  %v794 = vadd.f32 %v793, %v737
  %v795 = vadd.f32 %v794, %v742
  %v796 = vadd.f32 %v795, %v745
  %v797 = vadd.f32 %v796, %v750
  %v798 = vadd.f32 %v797, %v753
  %v799 = vadd.f32 %v798, %v758
  %v800 = vadd.f32 %v799, %v761
  %v801 = vadd.f32 %v800, %v766
  %v802 = vadd.f32 %v801, %v769
  %v803 = vrot.slane %v802, 4
  %v804 = vadd.f32 %v802, %v803
  %v805 = vrot.slane %v804, 2
  %v806 = vadd.f32 %v804, %v805
  %v807 = vrot.slane %v806, 1
  %v808 = vadd.f32 %v806, %v807
  %v809 = vmul.f32 %v808, %v344
  %v810 = vmul.f32 %v646, %v646
  %v811 = vmul.f32 %v649, %v649
  %v812 = vmul.f32 %v654, %v654
  %v813 = vmul.f32 %v657, %v657
  %v814 = vmul.f32 %v662, %v662
  %v815 = vmul.f32 %v665, %v665
  %v816 = vmul.f32 %v670, %v670
  %v817 = vmul.f32 %v673, %v673
  %v818 = vmul.f32 %v678, %v678
  %v819 = vmul.f32 %v681, %v681
  %v820 = vmul.f32 %v686, %v686
  %v821 = vmul.f32 %v689, %v689
  %v822 = vmul.f32 %v694, %v694
  %v823 = vmul.f32 %v697, %v697
  %v824 = vmul.f32 %v702, %v702
  %v825 = vmul.f32 %v705, %v705
  %v826 = vmul.f32 %v710, %v710
  %v827 = vmul.f32 %v713, %v713
  %v828 = vmul.f32 %v718, %v718
  %v829 = vmul.f32 %v721, %v721
  %v830 = vmul.f32 %v726, %v726
  %v831 = vmul.f32 %v729, %v729
  %v832 = vmul.f32 %v734, %v734
  %v833 = vmul.f32 %v737, %v737
  %v834 = vmul.f32 %v742, %v742
  %v835 = vmul.f32 %v745, %v745
  %v836 = vmul.f32 %v750, %v750
  %v837 = vmul.f32 %v753, %v753
  %v838 = vmul.f32 %v758, %v758
  %v839 = vmul.f32 %v761, %v761
  %v840 = vmul.f32 %v766, %v766
  %v841 = vmul.f32 %v769, %v769
  %v842 = vadd.f32 %v810, %v811
  %v843 = vadd.f32 %v842, %v812
  %v844 = vadd.f32 %v843, %v813
  %v845 = vadd.f32 %v844, %v814
  %v846 = vadd.f32 %v845, %v815
  %v847 = vadd.f32 %v846, %v816
  %v848 = vadd.f32 %v847, %v817
  %v849 = vadd.f32 %v848, %v818
  %v850 = vadd.f32 %v849, %v819
  %v851 = vadd.f32 %v850, %v820
  %v852 = vadd.f32 %v851, %v821
  %v853 = vadd.f32 %v852, %v822
  %v854 = vadd.f32 %v853, %v823
  %v855 = vadd.f32 %v854, %v824
  %v856 = vadd.f32 %v855, %v825
  %v857 = vadd.f32 %v856, %v826
  %v858 = vadd.f32 %v857, %v827
  %v859 = vadd.f32 %v858, %v828
  %v860 = vadd.f32 %v859, %v829
  %v861 = vadd.f32 %v860, %v830
  %v862 = vadd.f32 %v861, %v831
  %v863 = vadd.f32 %v862, %v832
  %v864 = vadd.f32 %v863, %v833
  %v865 = vadd.f32 %v864, %v834
  %v866 = vadd.f32 %v865, %v835
  %v867 = vadd.f32 %v866, %v836
  %v868 = vadd.f32 %v867, %v837
  %v869 = vadd.f32 %v868, %v838
  %v870 = vadd.f32 %v869, %v839
  %v871 = vadd.f32 %v870, %v840
  %v872 = vadd.f32 %v871, %v841
  %v873 = vrot.slane %v872, 4
  %v874 = vadd.f32 %v872, %v873
  %v875 = vrot.slane %v874, 2
  %v876 = vadd.f32 %v874, %v875
  %v877 = vrot.slane %v876, 1
  %v878 = vadd.f32 %v876, %v877
  %v879 = vmul.f32 %v878, %v344
  %v880 = vmul.f32 %v809, %v809
  %v881 = vsub.f32 %v879, %v880
  %v882 = vadd.f32 %v881, 1e-05
  %v883 = vrsqrt.pop %v882
  %v884 = vld [vmem:[%s5] sm:$0x1]
  %v885 = vmul.f32 %v883, %v884
  %v886 = vld [vmem:[%s6] sm:$0x1]
  %v887 = vmul.f32 %v809, %v885
  %v888 = vsub.f32 %v886, %v887
  %v889 = vlaneseq
  %v890 = vshrl.u32 %v889, 7
  %v891 = vsub.s32 0, %v890
  %v892 = vrot.slane %v885, %v891
  %v893 = vmul.f32 %v646, %v892
  %v894 = vmul.f32 %v649, %v892
  %v895 = vmul.f32 %v654, %v892
  %v896 = vmul.f32 %v657, %v892
  %v897 = vmul.f32 %v662, %v892
  %v898 = vmul.f32 %v665, %v892
  %v899 = vmul.f32 %v670, %v892
  %v900 = vmul.f32 %v673, %v892
  %v901 = vmul.f32 %v678, %v892
  %v902 = vmul.f32 %v681, %v892
  %v903 = vmul.f32 %v686, %v892
  %v904 = vmul.f32 %v689, %v892
  %v905 = vmul.f32 %v694, %v892
  %v906 = vmul.f32 %v697, %v892
  %v907 = vmul.f32 %v702, %v892
  %v908 = vmul.f32 %v705, %v892
  %v909 = vmul.f32 %v710, %v892
  %v910 = vmul.f32 %v713, %v892
  %v911 = vmul.f32 %v718, %v892
  %v912 = vmul.f32 %v721, %v892
  %v913 = vmul.f32 %v726, %v892
  %v914 = vmul.f32 %v729, %v892
  %v915 = vmul.f32 %v734, %v892
  %v916 = vmul.f32 %v737, %v892
  %v917 = vmul.f32 %v742, %v892
  %v918 = vmul.f32 %v745, %v892
  %v919 = vmul.f32 %v750, %v892
  %v920 = vmul.f32 %v753, %v892
  %v921 = vmul.f32 %v758, %v892
  %v922 = vmul.f32 %v761, %v892
  %v923 = vmul.f32 %v766, %v892
  %v924 = vmul.f32 %v769, %v892
  %v926 = vlaneseq
  %v927 = vshrl.u32 %v926, 7
  %v928 = vsub.s32 0, %v927
  %v929 = vrot.slane %v888, %v928
  %v931 = vadd.f32 %v893, %v929
  %v932 = vadd.f32 %v894, %v929
  %v933 = vadd.f32 %v895, %v929
  %v934 = vadd.f32 %v896, %v929
  %v935 = vadd.f32 %v897, %v929
  %v936 = vadd.f32 %v898, %v929
  %v937 = vadd.f32 %v899, %v929
  %v938 = vadd.f32 %v900, %v929
  %v939 = vadd.f32 %v901, %v929
  %v940 = vadd.f32 %v902, %v929
  %v941 = vadd.f32 %v903, %v929
  %v942 = vadd.f32 %v904, %v929
  %v943 = vadd.f32 %v905, %v929
  %v944 = vadd.f32 %v906, %v929
  %v945 = vadd.f32 %v907, %v929
  %v946 = vadd.f32 %v908, %v929
  %v947 = vadd.f32 %v909, %v929
  %v948 = vadd.f32 %v910, %v929
  %v949 = vadd.f32 %v911, %v929
  %v950 = vadd.f32 %v912, %v929
  %v951 = vadd.f32 %v913, %v929
  %v952 = vadd.f32 %v914, %v929
  %v953 = vadd.f32 %v915, %v929
  %v954 = vadd.f32 %v916, %v929
  %v955 = vadd.f32 %v917, %v929
  %v956 = vadd.f32 %v918, %v929
  %v957 = vadd.f32 %v919, %v929
  %v958 = vadd.f32 %v920, %v929
  %v959 = vadd.f32 %v921, %v929
  %v960 = vadd.f32 %v922, %v929
  %v961 = vadd.f32 %v923, %v929
  %v962 = vadd.f32 %v924, %v929
  %v963 = vmax.f32 %v931, 0.0
  %v964 = vmax.f32 %v932, 0.0
  %v965 = vmax.f32 %v933, 0.0
  %v966 = vmax.f32 %v934, 0.0
  %v967 = vmax.f32 %v935, 0.0
  %v968 = vmax.f32 %v936, 0.0
  %v969 = vmax.f32 %v937, 0.0
  %v970 = vmax.f32 %v938, 0.0
  %v971 = vmax.f32 %v939, 0.0
  %v972 = vmax.f32 %v940, 0.0
  %v973 = vmax.f32 %v941, 0.0
  %v974 = vmax.f32 %v942, 0.0
  %v975 = vmax.f32 %v943, 0.0
  %v976 = vmax.f32 %v944, 0.0
  %v977 = vmax.f32 %v945, 0.0
  %v978 = vmax.f32 %v946, 0.0
  %v979 = vmax.f32 %v947, 0.0
  %v980 = vmax.f32 %v948, 0.0
  %v981 = vmax.f32 %v949, 0.0
  %v982 = vmax.f32 %v950, 0.0
  %v983 = vmax.f32 %v951, 0.0
  %v984 = vmax.f32 %v952, 0.0
  %v985 = vmax.f32 %v953, 0.0
  %v986 = vmax.f32 %v954, 0.0
  %v987 = vmax.f32 %v955, 0.0
  %v988 = vmax.f32 %v956, 0.0
  %v989 = vmax.f32 %v957, 0.0
  %v990 = vmax.f32 %v958, 0.0
  %v991 = vmax.f32 %v959, 0.0
  %v992 = vmax.f32 %v960, 0.0
  %v993 = vmax.f32 %v961, 0.0
  %v994 = vmax.f32 %v962, 0.0
  %v995 = vld [vmem:[%s7] sm:$0xf]
  %v996 = vld [vmem:[%s7 + $0x4] sm:$0xf]
  %v997 = vld [vmem:[%s7 + $0x8] sm:$0xf]
  %v998 = vld [vmem:[%s7 + $0xc] sm:$0xf]
  %v999 = vld [vmem:[%s7 + $0x10] sm:$0xf]
  %v1000 = vld [vmem:[%s7 + $0x14] sm:$0xf]
  %v1001 = vld [vmem:[%s7 + $0x18] sm:$0xf]
  %v1002 = vld [vmem:[%s7 + $0x1c] sm:$0xf]
  %v1003 = vld [vmem:[%s7 + $0x20] sm:$0xf]
  %v1004 = vld [vmem:[%s7 + $0x24] sm:$0xf]
  %v1005 = vld [vmem:[%s7 + $0x28] sm:$0xf]
  %v1006 = vld [vmem:[%s7 + $0x2c] sm:$0xf]
  %v1007 = vld [vmem:[%s7 + $0x30] sm:$0xf]
  %v1008 = vld [vmem:[%s7 + $0x34] sm:$0xf]
  %v1009 = vld [vmem:[%s7 + $0x38] sm:$0xf]
  %v1010 = vld [vmem:[%s7 + $0x3c] sm:$0xf]
  %v1011 = vpack.c.bf16 %v964, %v963
  %v1012 = vpack.c.bf16 %v966, %v965
  %v1013 = vpack.c.bf16 %v968, %v967
  %v1014 = vpack.c.bf16 %v970, %v969
  %v1015 = vpack.c.bf16 %v972, %v971
  %v1016 = vpack.c.bf16 %v974, %v973
  %v1017 = vpack.c.bf16 %v976, %v975
  %v1018 = vpack.c.bf16 %v978, %v977
  %v1019 = vpack.c.bf16 %v980, %v979
  %v1020 = vpack.c.bf16 %v982, %v981
  %v1021 = vpack.c.bf16 %v984, %v983
  %v1022 = vpack.c.bf16 %v986, %v985
  %v1023 = vpack.c.bf16 %v988, %v987
  %v1024 = vpack.c.bf16 %v990, %v989
  %v1025 = vpack.c.bf16 %v992, %v991
  %v1026 = vpack.c.bf16 %v994, %v993
  %v1027 = vld [vmem:[%s8] sm:$0x1]
  %v1029 = vlaneseq
  %v1030 = vshrl.u32 %v1029, 7
  %v1031 = vsub.s32 0, %v1030
  %v1032 = vrot.slane %v1027, %v1031
  %v1050 = vunpack.c.l.b16 %v995
  %v1051 = vunpack.c.l.b16 %v996
  %v1052 = vunpack.c.l.b16 %v997
  %v1053 = vunpack.c.l.b16 %v998
  %v1054 = vunpack.c.l.b16 %v999
  %v1055 = vunpack.c.l.b16 %v1000
  %v1056 = vunpack.c.l.b16 %v1001
  %v1057 = vunpack.c.l.b16 %v1002
  %v1058 = vunpack.c.l.b16 %v1003
  %v1059 = vunpack.c.l.b16 %v1004
  %v1060 = vunpack.c.l.b16 %v1005
  %v1061 = vunpack.c.l.b16 %v1006
  %v1062 = vunpack.c.l.b16 %v1007
  %v1063 = vunpack.c.l.b16 %v1008
  %v1064 = vunpack.c.l.b16 %v1009
  %v1065 = vunpack.c.l.b16 %v1010
  %v1066 = vpack.c.b16 %v1051, %v1050
  %v1067 = vpack.c.b16 %v1053, %v1052
  %v1068 = vpack.c.b16 %v1055, %v1054
  %v1069 = vpack.c.b16 %v1057, %v1056
  %v1070 = vpack.c.b16 %v1059, %v1058
  %v1071 = vpack.c.b16 %v1061, %v1060
  %v1072 = vpack.c.b16 %v1063, %v1062
  %v1073 = vpack.c.b16 %v1065, %v1064
  %1082 = vmatprep.subr.bf16.mxu0 0
  %1083 = vmatpush1.bf16.msra.mxu0 %v1066
  %1084 = vmatprep.subr.bf16.mxu0 0
  %1085 = vmatpush1.bf16.msra.mxu0 %v1067
  %1086 = vmatprep.subr.bf16.mxu0 0
  %1087 = vmatpush1.bf16.msra.mxu0 %v1068
  %1088 = vmatprep.subr.bf16.mxu0 0
  %1089 = vmatpush1.bf16.msra.mxu0 %v1069
  %1090 = vmatprep.subr.bf16.mxu0 0
  %1091 = vmatpush1.bf16.msra.mxu0 %v1070
  %1092 = vmatprep.subr.bf16.mxu0 0
  %1093 = vmatpush1.bf16.msra.mxu0 %v1071
  %1094 = vmatprep.subr.bf16.mxu0 0
  %1095 = vmatpush1.bf16.msra.mxu0 %v1072
  %1096 = vmatprep.subr.bf16.mxu0 0
  %1097 = vmatpush1.bf16.msra.mxu0 %v1073
  %1098 = vmatprep.subr.bf16.mxu0 0
  %1099 = vmatpush1.bf16.msra.mxu0 0
  %1100 = vmatprep.subr.bf16.mxu0 0
  %1101 = vmatpush1.bf16.msra.mxu0 0
  %1102 = vmatprep.subr.bf16.mxu0 0
  %1103 = vmatpush1.bf16.msra.mxu0 0
  %1104 = vmatprep.subr.bf16.mxu0 0
  %1105 = vmatpush1.bf16.msra.mxu0 0
  %1106 = vmatprep.subr.bf16.mxu0 0
  %1107 = vmatpush1.bf16.msra.mxu0 0
  %1108 = vmatprep.subr.bf16.mxu0 0
  %1109 = vmatpush1.bf16.msra.mxu0 0
  %1110 = vmatprep.subr.bf16.mxu0 0
  %1111 = vmatpush1.bf16.msra.mxu0 0
  %1112 = vmatprep.subr.bf16.mxu0 0
  %1113 = vmatpush1.bf16.msra.mxu0 0
  %1114 = vmatprep.mubr.bf16.mxu0 0
  %1115 = vmatmul.mubr.bf16.gmra.mrb[0].mxu0 %v1011
  %v1116 = vpop.f32.mrb[0].mxu0
  %v1117 = vadd.f32 %v1032, %v1116
  %v1118 = vpop.f32.mrb[0].mxu0
  %v1119 = vpop.f32.mrb[0].mxu0
  %v1120 = vadd.f32 %v1032, %v1119
  %v1121 = vpop.f32.mrb[0].mxu0
  %1122 = vmatprep.mubr.bf16.mxu0 0
  %1123 = vmatmul.mubr.bf16.gmra.mrb[0].mxu0 %v1012
  %v1124 = vpop.f32.mrb[0].mxu0
  %v1125 = vadd.f32 %v1032, %v1124
  %v1126 = vpop.f32.mrb[0].mxu0
  %v1127 = vpop.f32.mrb[0].mxu0
  %v1128 = vadd.f32 %v1032, %v1127
  %v1129 = vpop.f32.mrb[0].mxu0
  %1130 = vmatprep.mubr.bf16.mxu0 0
  %1131 = vmatmul.mubr.bf16.gmra.mrb[0].mxu0 %v1013
  %v1132 = vpop.f32.mrb[0].mxu0
  %v1133 = vadd.f32 %v1032, %v1132
  %v1134 = vpop.f32.mrb[0].mxu0
  %v1135 = vpop.f32.mrb[0].mxu0
  %v1136 = vadd.f32 %v1032, %v1135
  %v1137 = vpop.f32.mrb[0].mxu0
  %1138 = vmatprep.mubr.bf16.mxu0 0
  %1139 = vmatmul.mubr.bf16.gmra.mrb[0].mxu0 %v1014
  %v1140 = vpop.f32.mrb[0].mxu0
  %v1141 = vadd.f32 %v1032, %v1140
  %v1142 = vpop.f32.mrb[0].mxu0
  %v1143 = vpop.f32.mrb[0].mxu0
  %v1144 = vadd.f32 %v1032, %v1143
  %v1145 = vpop.f32.mrb[0].mxu0
  %1146 = vmatprep.mubr.bf16.mxu0 0
  %1147 = vmatmul.mubr.bf16.gmra.mrb[0].mxu0 %v1015
  %v1148 = vpop.f32.mrb[0].mxu0
  %v1149 = vadd.f32 %v1032, %v1148
  %v1150 = vpop.f32.mrb[0].mxu0
  %v1151 = vpop.f32.mrb[0].mxu0
  %v1152 = vadd.f32 %v1032, %v1151
  %v1153 = vpop.f32.mrb[0].mxu0
  %1154 = vmatprep.mubr.bf16.mxu0 0
  %1155 = vmatmul.mubr.bf16.gmra.mrb[0].mxu0 %v1016
  %v1156 = vpop.f32.mrb[0].mxu0
  %v1157 = vadd.f32 %v1032, %v1156
  %v1158 = vpop.f32.mrb[0].mxu0
  %v1159 = vpop.f32.mrb[0].mxu0
  %v1160 = vadd.f32 %v1032, %v1159
  %v1161 = vpop.f32.mrb[0].mxu0
  %1162 = vmatprep.mubr.bf16.mxu0 0
  %1163 = vmatmul.mubr.bf16.gmra.mrb[0].mxu0 %v1017
  %v1164 = vpop.f32.mrb[0].mxu0
  %v1165 = vadd.f32 %v1032, %v1164
  %v1166 = vpop.f32.mrb[0].mxu0
  %v1167 = vpop.f32.mrb[0].mxu0
  %v1168 = vadd.f32 %v1032, %v1167
  %v1169 = vpop.f32.mrb[0].mxu0
  %1170 = vmatprep.mubr.bf16.mxu0 0
  %1171 = vmatmul.mubr.bf16.gmra.mrb[0].mxu0 %v1018
  %v1172 = vpop.f32.mrb[0].mxu0
  %v1173 = vadd.f32 %v1032, %v1172
  %v1174 = vpop.f32.mrb[0].mxu0
  %v1175 = vpop.f32.mrb[0].mxu0
  %v1176 = vadd.f32 %v1032, %v1175
  %v1177 = vpop.f32.mrb[0].mxu0
  %1178 = vmatprep.mubr.bf16.mxu0 0
  %1179 = vmatmul.mubr.bf16.gmra.mrb[0].mxu0 %v1019
  %v1180 = vpop.f32.mrb[0].mxu0
  %v1181 = vadd.f32 %v1032, %v1180
  %v1182 = vpop.f32.mrb[0].mxu0
  %v1183 = vpop.f32.mrb[0].mxu0
  %v1184 = vadd.f32 %v1032, %v1183
  %v1185 = vpop.f32.mrb[0].mxu0
  %1186 = vmatprep.mubr.bf16.mxu0 0
  %1187 = vmatmul.mubr.bf16.gmra.mrb[0].mxu0 %v1020
  %v1188 = vpop.f32.mrb[0].mxu0
  %v1189 = vadd.f32 %v1032, %v1188
  %v1190 = vpop.f32.mrb[0].mxu0
  %v1191 = vpop.f32.mrb[0].mxu0
  %v1192 = vadd.f32 %v1032, %v1191
  %v1193 = vpop.f32.mrb[0].mxu0
  %1194 = vmatprep.mubr.bf16.mxu0 0
  %1195 = vmatmul.mubr.bf16.gmra.mrb[0].mxu0 %v1021
  %v1196 = vpop.f32.mrb[0].mxu0
  %v1197 = vadd.f32 %v1032, %v1196
  %v1198 = vpop.f32.mrb[0].mxu0
  %v1199 = vpop.f32.mrb[0].mxu0
  %v1200 = vadd.f32 %v1032, %v1199
  %v1201 = vpop.f32.mrb[0].mxu0
  %1202 = vmatprep.mubr.bf16.mxu0 0
  %1203 = vmatmul.mubr.bf16.gmra.mrb[0].mxu0 %v1022
  %v1204 = vpop.f32.mrb[0].mxu0
  %v1205 = vadd.f32 %v1032, %v1204
  %v1206 = vpop.f32.mrb[0].mxu0
  %v1207 = vpop.f32.mrb[0].mxu0
  %v1208 = vadd.f32 %v1032, %v1207
  %v1209 = vpop.f32.mrb[0].mxu0
  %1210 = vmatprep.mubr.bf16.mxu0 0
  %1211 = vmatmul.mubr.bf16.gmra.mrb[0].mxu0 %v1023
  %v1212 = vpop.f32.mrb[0].mxu0
  %v1213 = vadd.f32 %v1032, %v1212
  %v1214 = vpop.f32.mrb[0].mxu0
  %v1215 = vpop.f32.mrb[0].mxu0
  %v1216 = vadd.f32 %v1032, %v1215
  %v1217 = vpop.f32.mrb[0].mxu0
  %1218 = vmatprep.mubr.bf16.mxu0 0
  %1219 = vmatmul.mubr.bf16.gmra.mrb[0].mxu0 %v1024
  %v1220 = vpop.f32.mrb[0].mxu0
  %v1221 = vadd.f32 %v1032, %v1220
  %v1222 = vpop.f32.mrb[0].mxu0
  %v1223 = vpop.f32.mrb[0].mxu0
  %v1224 = vadd.f32 %v1032, %v1223
  %v1225 = vpop.f32.mrb[0].mxu0
  %1226 = vmatprep.mubr.bf16.mxu0 0
  %1227 = vmatmul.mubr.bf16.gmra.mrb[0].mxu0 %v1025
  %v1228 = vpop.f32.mrb[0].mxu0
  %v1229 = vadd.f32 %v1032, %v1228
  %v1230 = vpop.f32.mrb[0].mxu0
  %v1231 = vpop.f32.mrb[0].mxu0
  %v1232 = vadd.f32 %v1032, %v1231
  %v1233 = vpop.f32.mrb[0].mxu0
  %1234 = vmatprep.mubr.bf16.mxu0 0
  %1235 = vmatmul.mubr.bf16.gmra.mrb[0].mxu0 %v1026
  %v1236 = vpop.f32.mrb[0].mxu0
  %v1237 = vadd.f32 %v1032, %v1236
  %v1238 = vpop.f32.mrb[0].mxu0
  %v1239 = vpop.f32.mrb[0].mxu0
  %v1240 = vadd.f32 %v1032, %v1239
  %v1241 = vpop.f32.mrb[0].mxu0
  %1242 = vdwg.mxu0
  %1243 = vst [vmem:[%s9] sm:$0xff] %v1117
  %1244 = vst [vmem:[%s9 + $0x8] sm:$0xff] %v1120
  %1245 = vst [vmem:[%s9 + $0x10] sm:$0xff] %v1125
  %1246 = vst [vmem:[%s9 + $0x18] sm:$0xff] %v1128
  %1247 = vst [vmem:[%s9 + $0x20] sm:$0xff] %v1133
  %1248 = vst [vmem:[%s9 + $0x28] sm:$0xff] %v1136
  %1249 = vst [vmem:[%s9 + $0x30] sm:$0xff] %v1141
  %1250 = vst [vmem:[%s9 + $0x38] sm:$0xff] %v1144
  %1251 = vst [vmem:[%s9 + $0x40] sm:$0xff] %v1149
  %1252 = vst [vmem:[%s9 + $0x48] sm:$0xff] %v1152
  %1253 = vst [vmem:[%s9 + $0x50] sm:$0xff] %v1157
  %1254 = vst [vmem:[%s9 + $0x58] sm:$0xff] %v1160
  %1255 = vst [vmem:[%s9 + $0x60] sm:$0xff] %v1165
  %1256 = vst [vmem:[%s9 + $0x68] sm:$0xff] %v1168
  %1257 = vst [vmem:[%s9 + $0x70] sm:$0xff] %v1173
  %1258 = vst [vmem:[%s9 + $0x78] sm:$0xff] %v1176
  %1259 = vst [vmem:[%s9 + $0x80] sm:$0xff] %v1181
  %1260 = vst [vmem:[%s9 + $0x88] sm:$0xff] %v1184
  %1261 = vst [vmem:[%s9 + $0x90] sm:$0xff] %v1189
  %1262 = vst [vmem:[%s9 + $0x98] sm:$0xff] %v1192
  %1263 = vst [vmem:[%s9 + $0xa0] sm:$0xff] %v1197
  %1264 = vst [vmem:[%s9 + $0xa8] sm:$0xff] %v1200
  %1265 = vst [vmem:[%s9 + $0xb0] sm:$0xff] %v1205
  %1266 = vst [vmem:[%s9 + $0xb8] sm:$0xff] %v1208
  %1267 = vst [vmem:[%s9 + $0xc0] sm:$0xff] %v1213
  %1268 = vst [vmem:[%s9 + $0xc8] sm:$0xff] %v1216
  %1269 = vst [vmem:[%s9 + $0xd0] sm:$0xff] %v1221
  %1270 = vst [vmem:[%s9 + $0xd8] sm:$0xff] %v1224
  %1271 = vst [vmem:[%s9 + $0xe0] sm:$0xff] %v1229
  %1272 = vst [vmem:[%s9 + $0xe8] sm:$0xff] %v1232
  %1273 = vst [vmem:[%s9 + $0xf0] sm:$0xff] %v1237
  %1274 = vst [vmem:[%s9 + $0xf8] sm:$0xff] %v1240
  // Predicated region
  $region38: #{_fused_forward.1} parent=0 // pred_check
    _
  $region39: #{_fused_forward.1} parent=0 // pred_check_branch
    %1276 = sbr.rel (0) target = $region41
  $region40: #{_fused_forward.1} parent=0 // pred_region
    _
  $region41: #{_fused_forward.1} parent=0 // pred_fallthru
    _
  // Predicated region
  $region42: #{_fused_forward.1} parent=0 // pred_check
    _
  $region43: #{_fused_forward.1} parent=0 // pred_check_branch
    %1278 = sbr.rel (0) target = $region45
  $region44: #{_fused_forward.1} parent=0 // pred_region
    _
  $region45: #{_fused_forward.1} parent=0 // pred_fallthru
    _

</llo_original>
